<compile_context>
chip_gen: v5e
topology: v5e:2x2
jax: 0.10.0
libtpu: 0.0.40
codegen_flags: <defaults>
</compile_context>

<pallas_src>
import functools

import numpy as np

import jax
import jax.numpy as jnp
from jax.experimental import pallas as pl
from jax.experimental.pallas import tpu as pltpu


def _vmem_capacity_bytes():
    """Physical VMEM of the local TPU generation (conservative fallback = v7x 64 MiB)."""
    try:
        return int(pltpu.get_tpu_info().vmem_capacity_bytes)
    except Exception:
        return 64 << 20


# ---------------------------------------------------------------------------
# Kernel 1: hh_score update
#   out[h, s] = sum_{b, g, q} attn[b, h*G + g, q, s] + prev_padded[h, s]
# attn is pre-reshaped to (H_attn*Q, S); rows [h*gq, (h+1)*gq) belong to KV head h.
# grid = (num_kv_heads // hblk, cdiv(S, TS))
# ---------------------------------------------------------------------------
def _score_kernel(attn_ref, prev_ref, out_ref, *, hblk, gq):
    # attn_ref: (hblk*gq, ts)  (sublane-dense rows)   prev_ref / out_ref: (hblk, ts) f32
    for hl in range(hblk):                                    # static, <= 8
        rows = attn_ref[pl.ds(hl * gq, gq), :].astype(jnp.float32)   # (gq, ts)
        out_ref[hl, :] = jnp.sum(rows, axis=0) + prev_ref[hl, :]
    # TODO(synk): for very large Q (prefill) a 0/1 selector matmul on the MXU (or a Q-tiled
    # accumulation grid axis) would keep the reduction off the VALU/XLU slots.


def _pick_score_tiles(num_kv_heads, gq, seq_len, itemsize, vmem_cap):
    """Choose (head_block, seq_tile) so one attn block stays near the per-buffer budget."""
    # 8 heads/block when possible (full sublane groups for the f32 outputs); otherwise the
    # whole head axis (block == full dim is always legal, keeps (8,128) rules satisfied).
    hblk = 8 if num_kv_heads % 8 == 0 else num_kv_heads
    budget = (4 << 20) if vmem_cap <= (64 << 20) else (8 << 20)   # bytes per pipeline buffer
    per_lane = hblk * gq * itemsize                               # attn bytes per seq lane
    ts = (budget // max(per_lane, 1)) // 128 * 128
    ts = max(ts, 128)
    if seq_len <= ts:
        ts = seq_len          # single full-S tile (full-dim block is always legal)
    return hblk, ts


def score_update(attn, prev_hh_padded, num_kv_heads):
    b, h_attn, q, s = attn.shape
    assert b == 1
    g = h_attn // num_kv_heads
    gq = g * q
    itemsize = jnp.dtype(attn.dtype).itemsize
    cap = _vmem_capacity_bytes()
    hblk, ts = _pick_score_tiles(num_kv_heads, gq, s, itemsize, cap)
    r_blk = hblk * gq

    # Merge (head, query) into one sublane-dense row axis: (H_attn*Q, S).  Free reshape
    # (leading dims merged, lane dim untouched); accumulation cast happens inside the kernel.
    attn2 = attn.reshape(h_attn * q, s)
    prev2 = prev_hh_padded.astype(jnp.float32)            # (H, S)

    kernel = functools.partial(_score_kernel, hblk=hblk, gq=gq)
    grid = (num_kv_heads // hblk, pl.cdiv(s, ts))

    # Dense-block VMEM need (double-buffered pipeline) + headroom, clamped to this
    # generation's physical VMEM (64 MiB on v7x, 128 MiB on v5e/v6e).
    need = 2 * (r_blk * ts * itemsize + 2 * hblk * ts * 4)
    vmem_limit = int(min(max(need + (4 << 20), 16 << 20), cap - (4 << 20)))
    # TODO(synk): for very long prefill (Q in the thousands) also tile Q with an
    # "arbitrary" accumulation axis so a single block never has to hold all of Q.

    return pl.pallas_call(
        kernel,
        out_shape=jax.ShapeDtypeStruct((num_kv_heads, s), jnp.float32),
        grid_spec=pltpu.PrefetchScalarGridSpec(
            num_scalar_prefetch=0,
            grid=grid,
            in_specs=[
                pl.BlockSpec((r_blk, ts), lambda hb, st: (hb, st)),
                pl.BlockSpec((hblk, ts), lambda hb, st: (hb, st)),
            ],
            out_specs=pl.BlockSpec((hblk, ts), lambda hb, st: (hb, st)),
        ),
        compiler_params=pltpu.CompilerParams(
            dimension_semantics=("parallel", "parallel"),
            vmem_limit_bytes=vmem_limit,
        ),
    )(attn2, prev2)


# ---------------------------------------------------------------------------
# Kernel 2: per-head gather of kept tokens from the KV cache.
#   grid = (num_kv_heads 'parallel', num_chunks 'arbitrary')
#   - output block (n_keep, D) is resident across the chunk axis (constant block index)
#   - chunk input blocks stream the front region [0, seq_len - recent_size)
#   - the contiguous recent window + last token is DMA'd HBM -> output VMEM directly
#   - scattered heavy-hitter rows are gathered 8-at-a-time into dense stores
# ---------------------------------------------------------------------------
_GROUP = 8


def _gather_kernel(keep_ref, bounds_ref, kc_ref, vc_ref, k_any, v_any,
                   ko_ref, vo_ref, sem_ref, *,
                   hh_size, chunk, num_chunks, tail_src, tail_len, group):
    # keep_ref  : SMEM int32 (H*hh_size,)     flattened sorted heavy-hitter indices
    # bounds_ref: SMEM int32 (H*(nc+1),)      per-head cumulative counts per chunk
    # kc_ref/vc_ref: (chunk, D) VMEM views    ko_ref/vo_ref: (n_keep, D) resident blocks
    # k_any/v_any : raw HBM refs (1, H, S_full, D)
    h = pl.program_id(0)
    c = pl.program_id(1)
    d = kc_ref.shape[-1]
    nc1 = num_chunks + 1

    def _tail_copies():
        ck = pltpu.make_async_copy(
            k_any.at[0, h, pl.ds(tail_src, tail_len), :],
            ko_ref.at[pl.ds(hh_size, tail_len), :], sem_ref.at[0])
        cv = pltpu.make_async_copy(
            v_any.at[0, h, pl.ds(tail_src, tail_len), :],
            vo_ref.at[pl.ds(hh_size, tail_len), :], sem_ref.at[1])
        return ck, cv

    # 1) Recent window + always-kept last token: one direct DMA per tensor into the
    #    resident output block; started on the first chunk, waited on the last chunk so it
    #    overlaps with the heavy-hitter gather.
    @pl.when(c == 0)
    def _():
        ck, cv = _tail_copies()
        ck.start()
        cv.start()

    # 2) Heavy-hitter rows whose source index lies in this chunk.  Their destination rows
    #    [lo, hi) are contiguous because the keep indices are sorted.
    lo = bounds_ref[h * nc1 + c]
    hi = bounds_ref[h * nc1 + c + 1]

    if group > 0:
        row_ids = jax.lax.broadcasted_iota(jnp.int32, (group, 1), 0)

        def full_body(t, carry):
            j0 = lo + t * group
            kblk = jnp.zeros((group, d), kc_ref.dtype)
            vblk = jnp.zeros((group, d), vc_ref.dtype)
            for r in range(group):                       # static unroll
                src = keep_ref[h * hh_size + j0 + r]
                local = src - c * chunk
                krow = kc_ref[pl.ds(local, 1), :]        # (1, D)
                vrow = vc_ref[pl.ds(local, 1), :]
                sel = row_ids == r
                kblk = jnp.where(sel, krow, kblk)
                vblk = jnp.where(sel, vrow, vblk)
            ko_ref[pl.ds(j0, group), :] = kblk           # one dense multi-row store
            vo_ref[pl.ds(j0, group), :] = vblk
            return carry

        n_full = (hi - lo) // group
        jax.lax.fori_loop(0, n_full, full_body, 0)
        rem_start = lo + n_full * group
    else:
        rem_start = lo

    def rem_body(j, carry):
        src = keep_ref[h * hh_size + j]
        local = src - c * chunk
        ko_ref[pl.ds(j, 1), :] = kc_ref[pl.ds(local, 1), :]
        vo_ref[pl.ds(j, 1), :] = vc_ref[pl.ds(local, 1), :]
        return carry

    jax.lax.fori_loop(rem_start, hi, rem_body, 0)

    # 3) Make sure the tail DMA has landed before Pallas writes the block back to HBM.
    @pl.when(c == num_chunks - 1)
    def _():
        ck, cv = _tail_copies()
        ck.wait()
        cv.wait()


def _pick_kv_chunk(s_full, head_dim, itemsize, budget):
    rows = (budget // max(head_dim * itemsize, 1)) // 8 * 8
    rows = max(rows, 8)
    if rows >= s_full:
        return s_full
    return rows


def kv_gather(key_states, value_states, keep_topk, *, hh_size, recent_size, seq_len):
    b, h, s_full, d = key_states.shape
    n_keep = hh_size + recent_size + 1
    tail_src = seq_len - recent_size
    tail_len = recent_size + 1              # recent window + last token (index seq_len)
    front_len = seq_len - recent_size       # heavy hitters live in [0, front_len)

    itemsize = jnp.dtype(key_states.dtype).itemsize
    cap = _vmem_capacity_bytes()
    chunk = _pick_kv_chunk(s_full, d, itemsize, 2 << 20)   # ~2 MiB per chunk buffer
    num_chunks = -(-front_len // chunk)

    # Per-head, per-chunk boundaries of the sorted keep indices (scalar-prefetched, 1-D).
    edges = jnp.arange(num_chunks + 1, dtype=jnp.int32) * chunk
    bounds = jax.vmap(lambda row: jnp.searchsorted(row, edges, side="left"))(keep_topk)
    bounds = bounds.astype(jnp.int32).reshape(-1)          # (H*(nc+1),)
    keep_flat = keep_topk.astype(jnp.int32).reshape(-1)    # (H*hh_size,)

    group = _GROUP if (hh_size >= _GROUP and n_keep >= _GROUP) else 0
    kernel = functools.partial(
        _gather_kernel, hh_size=hh_size, chunk=chunk, num_chunks=num_chunks,
        tail_src=tail_src, tail_len=tail_len, group=group)

    # K/V chunk double buffers + resident K/V output blocks (assume double-buffered).
    need = 2 * 2 * chunk * d * itemsize + 2 * 2 * n_keep * d * itemsize
    vmem_limit = int(min(max(need + (4 << 20), 16 << 20), cap - (4 << 20)))
    # TODO(synk): for extreme n_keep (very long contexts) also chunk the output rows so the
    # resident (n_keep, D) blocks never approach the physical VMEM capacity.

    return pl.pallas_call(
        kernel,
        out_shape=(
            jax.ShapeDtypeStruct((b, h, n_keep, d), key_states.dtype),
            jax.ShapeDtypeStruct((b, h, n_keep, d), value_states.dtype),
        ),
        grid_spec=pltpu.PrefetchScalarGridSpec(
            num_scalar_prefetch=2,
            grid=(h, num_chunks),
            in_specs=[
                pl.BlockSpec((None, None, chunk, d), lambda hh, cc, *_: (0, hh, cc, 0)),
                pl.BlockSpec((None, None, chunk, d), lambda hh, cc, *_: (0, hh, cc, 0)),
                pl.BlockSpec(memory_space=pl.ANY),
                pl.BlockSpec(memory_space=pl.ANY),
            ],
            out_specs=(
                pl.BlockSpec((None, None, n_keep, d), lambda hh, cc, *_: (0, hh, 0, 0)),
                pl.BlockSpec((None, None, n_keep, d), lambda hh, cc, *_: (0, hh, 0, 0)),
            ),
            scratch_shapes=[pltpu.SemaphoreType.DMA((2,))],
        ),
        compiler_params=pltpu.CompilerParams(
            dimension_semantics=("parallel", "arbitrary"),
            vmem_limit_bytes=vmem_limit,
        ),
    )(keep_flat, bounds, key_states, value_states, key_states, value_states)


# ---------------------------------------------------------------------------
# Module equivalent
# ---------------------------------------------------------------------------
class H2OKVCache:
    """JAX/Pallas port of the PyTorch H2OKVCache module (no learnable weights)."""

    def __init__(self, hh_ratio, recent_ratio, hh_fixed_size=1, recent_fixed_size=1):
        self.hh_score = None
        self.hh_ratio = hh_ratio
        self.recent_ratio = recent_ratio
        self.hh_fixed_size = hh_fixed_size
        self.recent_fixed_size = recent_fixed_size

    def __call__(self, past_key_values, attn_score_cache):
        if past_key_values is None:
            return None
        key_states, value_states = past_key_values
        bsz, num_kv_heads, s_full, head_dim = key_states.shape
        assert bsz == 1
        num_groups = attn_score_cache.shape[1] // num_kv_heads
        self._update_hh_score(num_groups, attn_score_cache)

        seq_len = s_full - 1
        hh_size = int(self.hh_ratio * seq_len) + self.hh_fixed_size
        recent_size = int(self.recent_ratio * seq_len) + self.recent_fixed_size
        if seq_len <= hh_size + recent_size:
            return past_key_values

        # TODO(synk): top-k selection / sort stays in plain JAX (data-dependent sorting
        # has no clean Pallas TPU primitive); the gather itself is done in-kernel.
        select = self.hh_score[:, : seq_len - recent_size]
        _, keep_topk = jax.lax.top_k(select, hh_size)
        keep_topk = jnp.sort(keep_topk, axis=-1).astype(jnp.int32)

        # The PyTorch code gathers via a scattered boolean mask (which yields the kept
        # indices in ascending order) and then re-appends the last token.  Since all
        # top-k indices are < seq_len - recent_size, the kept row order is exactly
        # [sorted top-k, recent window, last token].
        k_hh_recent, v_hh_recent = kv_gather(
            key_states, value_states, keep_topk,
            hh_size=hh_size, recent_size=recent_size, seq_len=seq_len)

        keep_recent = jnp.broadcast_to(
            jnp.arange(seq_len - recent_size, seq_len, dtype=jnp.int32),
            (num_kv_heads, recent_size),
        )
        keep_idx = jnp.concatenate([keep_topk, keep_recent], axis=-1)  # (H, K)
        # Tiny (H, K) score gather kept as plain JAX bookkeeping.
        self.hh_score = jnp.take_along_axis(self.hh_score, keep_idx, axis=-1)
        return (k_hh_recent, v_hh_recent)

    def _update_hh_score(self, num_groups, attn_score_cache):
        bsz, h_attn, num_new_tokens, s = attn_score_cache.shape
        assert bsz == 1
        num_kv_heads = h_attn // num_groups
        if self.hh_score is None:
            prev = jnp.zeros((num_kv_heads, s), jnp.float32)
        else:
            prev = jnp.pad(
                self.hh_score.astype(jnp.float32),
                ((0, 0), (0, s - self.hh_score.shape[1])),
            )
        self.hh_score = score_update(attn_score_cache, prev, num_kv_heads)


# ---------------------------------------------------------------------------
# Pure-numpy reference (mirrors the PyTorch forward semantics)
# ---------------------------------------------------------------------------
def _reference(key_states, value_states, attn, prev_hh, hh_ratio, recent_ratio,
               hh_fixed=1, recent_fixed=1):
    k = np.asarray(key_states)
    v = np.asarray(value_states)
    a = np.asarray(attn)
    bsz, num_kv, s_full, d = k.shape
    g = a.shape[1] // num_kv
    q = a.shape[2]
    score = a.sum(0).sum(1).reshape(num_kv, g, -1).sum(1)
    if prev_hh is not None:
        score = score.copy()
        score[:, :-q] += np.asarray(prev_hh)
    seq_len = s_full - 1
    hh_size = int(hh_ratio * seq_len) + hh_fixed
    recent_size = int(recent_ratio * seq_len) + recent_fixed
    if seq_len <= hh_size + recent_size:
        return (k, v), score
    select = score[:, : seq_len - recent_size]
    topk = np.sort(np.argsort(-select, axis=-1, kind="stable")[:, :hh_size], axis=-1)
    recent = np.tile(np.arange(seq_len - recent_size, seq_len), (num_kv, 1))
    keep = np.concatenate([topk, recent], axis=-1)
    mask = np.zeros_like(score, dtype=bool)
    np.put_along_axis(mask, keep, True, axis=-1)
    k_last = k[:, :, -1, :]
    v_last = v[:, :, -1, :]
    k_trim = k[0, :, :-1, :]
    v_trim = v[0, :, :-1, :]
    k_keep = np.stack([k_trim[i][mask[i, :seq_len]] for i in range(num_kv)]).reshape(bsz, num_kv, -1, d)
    v_keep = np.stack([v_trim[i][mask[i, :seq_len]] for i in range(num_kv)]).reshape(bsz, num_kv, -1, d)
    k_out = np.concatenate([k_keep, k_last[:, :, None, :]], axis=2)
    v_out = np.concatenate([v_keep, v_last[:, :, None, :]], axis=2)
    hh_new = np.stack([score[i][mask[i]] for i in range(num_kv)])
    return (k_out, v_out), hh_new


if __name__ == "__main__":
    key = jax.random.PRNGKey(0)
    k1, k2, k3, k4 = jax.random.split(key, 4)

    bsz = 1
    num_kv_heads = 4
    num_attn_heads = 8      # GQA: num_groups = 2
    s_full = 16             # current key/value cache length
    num_new_tokens = 4
    head_dim = 128

    key_states = jax.random.normal(k1, (bsz, num_kv_heads, s_full, head_dim), jnp.float32)
    value_states = jax.random.normal(k2, (bsz, num_kv_heads, s_full, head_dim), jnp.float32)
    attn_score_cache = jax.nn.softmax(
        jax.random.normal(k3, (bsz, num_attn_heads, num_new_tokens, s_full), jnp.float32),
        axis=-1,
    )
    prev_hh = jax.random.uniform(k4, (num_kv_heads, s_full - num_new_tokens), jnp.float32)

    cache = H2OKVCache(hh_ratio=0.25, recent_ratio=0.25)
    cache.hh_score = prev_hh  # simulate an earlier decoding step

    out = cache((key_states, value_states), attn_score_cache)
    k_out, v_out = out
    hh_new = cache.hh_score
    jax.block_until_ready((k_out, v_out, hh_new))

    (k_ref, v_ref), hh_ref = _reference(
        key_states, value_states, attn_score_cache, prev_hh,
        hh_ratio=0.25, recent_ratio=0.25,
    )
    np.testing.assert_allclose(np.asarray(k_out), k_ref, rtol=1e-5, atol=1e-5)
    np.testing.assert_allclose(np.asarray(v_out), v_ref, rtol=1e-5, atol=1e-5)
    np.testing.assert_allclose(np.asarray(hh_new), hh_ref, rtol=1e-5, atol=1e-5)

    print("KERNEL_OK")
</pallas_src>

<mosaic_0001>
module attributes {stable_mosaic.version = 11 : i64} {
  func.func @_score_kernel(%arg0: i32, %arg1: i32, %arg2: memref<32x16xf32, #tpu.memory_space<vmem>>, %arg3: memref<4x16xf32, #tpu.memory_space<vmem>>, %arg4: memref<4x16xf32, #tpu.memory_space<vmem>>) attributes {dimension_semantics = [#tpu.dimension_semantics<parallel>, #tpu.dimension_semantics<parallel>], iteration_bounds = array<i64: 1, 1>, scalar_prefetch = 0 : i64, scratch_operands = 0 : i64, tpu.core_type = #tpu.core_type<tc>, window_params = [{transform_indices = @transform_0, window_bounds = array<i64: 32, 16>}, {transform_indices = @transform_1, window_bounds = array<i64: 4, 16>}, {transform_indices = @transform_2, window_bounds = array<i64: 4, 16>}]} {
    %c0 = arith.constant 0 : index
    %c0_0 = arith.constant 0 : index
    %0 = vector.load %arg2[%c0, %c0_0] : memref<32x16xf32, #tpu.memory_space<vmem>>, vector<8x16xf32>
    %cst = arith.constant dense<0.000000e+00> : vector<16xf32>
    %1 = vector.multi_reduction <add>, %0, %cst [0] : vector<8x16xf32> to vector<16xf32>
    %c0_1 = arith.constant 0 : index
    %c0_2 = arith.constant 0 : index
    %2 = vector.load %arg3[%c0_1, %c0_2] : memref<4x16xf32, #tpu.memory_space<vmem>>, vector<1x16xf32>
    %3 = vector.shape_cast %2 : vector<1x16xf32> to vector<16xf32>
    %4 = arith.addf %1, %3 : vector<16xf32>
    %c0_3 = arith.constant 0 : index
    %c0_4 = arith.constant 0 : index
    %5 = vector.load %arg4[%c0_3, %c0_4] : memref<4x16xf32, #tpu.memory_space<vmem>>, vector<1x16xf32>
    %6 = vector.shape_cast %5 : vector<1x16xf32> to vector<16xf32>
    %7 = vector.shape_cast %4 : vector<16xf32> to vector<1x16xf32>
    tpu.vector_store %arg4[%c0_3, %c0_4], %7 {strides = array<i32>} : memref<4x16xf32, #tpu.memory_space<vmem>>, vector<1x16xf32>,
    %c8 = arith.constant 8 : index
    %c0_5 = arith.constant 0 : index
    %8 = vector.load %arg2[%c8, %c0_5] : memref<32x16xf32, #tpu.memory_space<vmem>>, vector<8x16xf32>
    %cst_6 = arith.constant dense<0.000000e+00> : vector<16xf32>
    %9 = vector.multi_reduction <add>, %8, %cst_6 [0] : vector<8x16xf32> to vector<16xf32>
    %c1 = arith.constant 1 : index
    %c0_7 = arith.constant 0 : index
    %10 = vector.load %arg3[%c1, %c0_7] : memref<4x16xf32, #tpu.memory_space<vmem>>, vector<1x16xf32>
    %11 = vector.shape_cast %10 : vector<1x16xf32> to vector<16xf32>
    %12 = arith.addf %9, %11 : vector<16xf32>
    %c1_8 = arith.constant 1 : index
    %c0_9 = arith.constant 0 : index
    %13 = vector.load %arg4[%c1_8, %c0_9] : memref<4x16xf32, #tpu.memory_space<vmem>>, vector<1x16xf32>
    %14 = vector.shape_cast %13 : vector<1x16xf32> to vector<16xf32>
    %15 = vector.shape_cast %12 : vector<16xf32> to vector<1x16xf32>
    tpu.vector_store %arg4[%c1_8, %c0_9], %15 {strides = array<i32>} : memref<4x16xf32, #tpu.memory_space<vmem>>, vector<1x16xf32>,
    %c16 = arith.constant 16 : index
    %c0_10 = arith.constant 0 : index
    %16 = vector.load %arg2[%c16, %c0_10] : memref<32x16xf32, #tpu.memory_space<vmem>>, vector<8x16xf32>
    %cst_11 = arith.constant dense<0.000000e+00> : vector<16xf32>
    %17 = vector.multi_reduction <add>, %16, %cst_11 [0] : vector<8x16xf32> to vector<16xf32>
    %c2 = arith.constant 2 : index
    %c0_12 = arith.constant 0 : index
    %18 = vector.load %arg3[%c2, %c0_12] : memref<4x16xf32, #tpu.memory_space<vmem>>, vector<1x16xf32>
    %19 = vector.shape_cast %18 : vector<1x16xf32> to vector<16xf32>
    %20 = arith.addf %17, %19 : vector<16xf32>
    %c2_13 = arith.constant 2 : index
    %c0_14 = arith.constant 0 : index
    %21 = vector.load %arg4[%c2_13, %c0_14] : memref<4x16xf32, #tpu.memory_space<vmem>>, vector<1x16xf32>
    %22 = vector.shape_cast %21 : vector<1x16xf32> to vector<16xf32>
    %23 = vector.shape_cast %20 : vector<16xf32> to vector<1x16xf32>
    tpu.vector_store %arg4[%c2_13, %c0_14], %23 {strides = array<i32>} : memref<4x16xf32, #tpu.memory_space<vmem>>, vector<1x16xf32>,
    %c24 = arith.constant 24 : index
    %c0_15 = arith.constant 0 : index
    %24 = vector.load %arg2[%c24, %c0_15] : memref<32x16xf32, #tpu.memory_space<vmem>>, vector<8x16xf32>
    %cst_16 = arith.constant dense<0.000000e+00> : vector<16xf32>
    %25 = vector.multi_reduction <add>, %24, %cst_16 [0] : vector<8x16xf32> to vector<16xf32>
    %c3 = arith.constant 3 : index
    %c0_17 = arith.constant 0 : index
    %26 = vector.load %arg3[%c3, %c0_17] : memref<4x16xf32, #tpu.memory_space<vmem>>, vector<1x16xf32>
    %27 = vector.shape_cast %26 : vector<1x16xf32> to vector<16xf32>
    %28 = arith.addf %25, %27 : vector<16xf32>
    %c3_18 = arith.constant 3 : index
    %c0_19 = arith.constant 0 : index
    %29 = vector.load %arg4[%c3_18, %c0_19] : memref<4x16xf32, #tpu.memory_space<vmem>>, vector<1x16xf32>
    %30 = vector.shape_cast %29 : vector<1x16xf32> to vector<16xf32>
    %31 = vector.shape_cast %28 : vector<16xf32> to vector<1x16xf32>
    tpu.vector_store %arg4[%c3_18, %c0_19], %31 {strides = array<i32>} : memref<4x16xf32, #tpu.memory_space<vmem>>, vector<1x16xf32>,
    return
  }
  func.func @transform_0(%arg0: i32, %arg1: i32) -> (i32, i32) {
    %c0_i32 = arith.constant 0 : i32
    return %arg0, %arg1 : i32, i32
  }
  func.func @transform_1(%arg0: i32, %arg1: i32) -> (i32, i32) {
    %c0_i32 = arith.constant 0 : i32
    return %arg0, %arg1 : i32, i32
  }
  func.func @transform_2(%arg0: i32, %arg1: i32) -> (i32, i32) {
    %c0_i32 = arith.constant 0 : i32
    return %arg0, %arg1 : i32, i32
  }
}

</mosaic_0001>

<llo_original>
// kernel: tpu_custom_call.1
$region0: #{tpu_custom_call.1}
  #allocation0 [shape = 'u32[]', space=smem, size = 0x4, offset = 0x4, fixed_abs, tag = 'smem constant byte address 0x4 - core index']
  #allocation1 [shape = 'u32[72,128]{1,0:T(1,128)}', space=vmem, size = 0x9000, scoped, tag = 'internal scratch']
  %s0 = inlined_call_operand.vmem [shape: f32[32,16], index: 0, kind: input, shape index: {}]
  %s1 = inlined_call_operand.vmem [shape: f32[4,16], index: 1, kind: input, shape index: {}]
  %s2 = inlined_call_operand.hbm [shape: f32[4,16], index: 2, kind: output, shape index: {}]
  %s3 = sld [smem:[#allocation0]]
  $region18: #{tpu_custom_call.1} parent=0
    _
  %s5 = ssub.s32 1, %s3
  %s6 = scalar_select 0, %s5, %s3
  $region1: #{tpu_custom_call.1} parent=0
    #allocation2 [shape = 'u8[2048]{0}', space=vmem, size = 0x800, scoped, tag = 'output window, operand 0, single buffered']
    #allocation3 [shape = 's32[1]{0}', space=sflag, size = 0x4, scoped, tag = 'scoped memory for tpu_custom_call.1']
    %7 = vsyncpa [#allocation3], 0
    // Predicated region
    $region2: #{tpu_custom_call.1} parent=1 // pred_check
      _
    $region3: #{tpu_custom_call.1} parent=1 // pred_check_branch
      %9 = sbr.rel (0) target = $region5
    $region4: #{tpu_custom_call.1} parent=1 // pred_region
      _
    $region5: #{tpu_custom_call.1} parent=1 // pred_fallthru
      _
    // Predicated region
    $region6: #{tpu_custom_call.1} parent=1 // pred_check
      _
    $region7: #{tpu_custom_call.1} parent=1 // pred_check_branch
      %11 = sbr.rel (0) target = $region9
    $region8: #{tpu_custom_call.1} parent=1 // pred_region
      _
    $region9: #{tpu_custom_call.1} parent=1 // pred_fallthru
      _
    %v12 = vld [vmem:[%s0] sm:$0xff]
    %vm13 = vcmask 130048
    %v14 = vsel %vm13, %v12, 0.0
    %v15 = vrot.slane %v14, 4
    %v16 = vadd.f32 %v14, %v15
    %v17 = vrot.slane %v16, 2
    %v18 = vadd.f32 %v16, %v17
    %v19 = vrot.slane %v18, 1
    %v20 = vadd.f32 %v18, %v19
    %v21 = vld [vmem:[%s1] sm:$0x1]
    %v22 = vadd.f32 %v20, %v21
    %vm23 = vcmask 122880
    %24 = vst.msk [vmem:[#allocation2] sm:$0x1] %vm23, %v22
    %v25 = vld [vmem:[%s0 + $0x8] sm:$0xff]
    %v26 = vsel %vm13, %v25, 0.0
    %v27 = vrot.slane %v26, 4
    %v28 = vadd.f32 %v26, %v27
    %v29 = vrot.slane %v28, 2
    %v30 = vadd.f32 %v28, %v29
    %v31 = vrot.slane %v30, 1
    %v32 = vadd.f32 %v30, %v31
    %v33 = vld [vmem:[%s1 + $0x1] sm:$0x1]
    %v34 = vadd.f32 %v32, %v33
    %35 = vst.msk [vmem:[#allocation2 + $0x1] sm:$0x1] %vm23, %v34
    %v36 = vld [vmem:[%s0 + $0x10] sm:$0xff]
    %v37 = vsel %vm13, %v36, 0.0
    %v38 = vrot.slane %v37, 4
    %v39 = vadd.f32 %v37, %v38
    %v40 = vrot.slane %v39, 2
    %v41 = vadd.f32 %v39, %v40
    %v42 = vrot.slane %v41, 1
    %v43 = vadd.f32 %v41, %v42
    %v44 = vld [vmem:[%s1 + $0x2] sm:$0x1]
    %v45 = vadd.f32 %v43, %v44
    %46 = vst.msk [vmem:[#allocation2 + $0x2] sm:$0x1] %vm23, %v45
    %v47 = vld [vmem:[%s0 + $0x18] sm:$0xff]
    %v48 = vsel %vm13, %v47, 0.0
    %v49 = vrot.slane %v48, 4
    %v50 = vadd.f32 %v48, %v49
    %v51 = vrot.slane %v50, 2
    %v52 = vadd.f32 %v50, %v51
    %v53 = vrot.slane %v52, 1
    %v54 = vadd.f32 %v52, %v53
    %v55 = vld [vmem:[%s1 + $0x3] sm:$0x1]
    %v56 = vadd.f32 %v54, %v55
    %57 = vst.msk [vmem:[#allocation2 + $0x3] sm:$0x1] %vm23, %v56
    // Predicated region
    $region10: #{tpu_custom_call.1} parent=1 // pred_check
      _
    $region11: #{tpu_custom_call.1} parent=1 // pred_check_branch
      %59 = sbr.rel (0) target = $region13
    $region12: #{tpu_custom_call.1} parent=1 // pred_region
      %61 = vsyncadd [#allocation3], 0
      %s63 = sshll.u32 [#allocation2], 4
      %s64 = int_to_ptr.vmem [resolvable:$true] %s63
      %s65 = sshll.u32 %s2, 4
      %s66 = int_to_ptr.hbm [resolvable:$true] %s65
      %68 = dma.vmem_to_hbm [thread:$0]  %s64, 64, %s66, [#allocation3]
    $region13: #{tpu_custom_call.1} parent=1 // pred_fallthru
      _
    // Predicated region
    $region14: #{tpu_custom_call.1} parent=1 // pred_check
      _
    $region15: #{tpu_custom_call.1} parent=1 // pred_check_branch
      %70 = sbr.rel (0) target = $region17
    $region16: #{tpu_custom_call.1} parent=1 // pred_region
      %72 = dma.done [#allocation3], 64
    $region17: #{tpu_custom_call.1} parent=1 // pred_fallthru
      _
    %73 = vsyncpa [#allocation3], 1

</llo_original>
